<compile_context>
chip_gen: v7x
topology: tpu7x:2x2x1
jax: 0.10.0
libtpu: 0.0.40
codegen_flags: <defaults>
</compile_context>

<pallas_src>
import functools

import numpy as np
import jax
import jax.numpy as jnp
from jax import lax
from jax.experimental import pallas as pl
from jax.experimental.pallas import tpu as pltpu

_LANES = 128
_SUBLANES = 8
_TEMP_F32_PER_ELEM = 6  # x_f32, col, onehot, z, exp(z-zmax) + slack (f32-equivalent)


def _ldam_kernel(x_ref, tgt_ref, sm_ref, out_ref, acc_ref, *, s, n_valid, tile_n):
    i = pl.program_id(0)
    n_tiles = pl.num_programs(0)

    @pl.when(i == 0)
    def _init():
        acc_ref[...] = jnp.zeros_like(acc_ref)

    x = x_ref[...].astype(jnp.float32)          # (tile_n, C) native dtype -> f32
    tgt = tgt_ref[...]                          # (tile_n, 1) int32
    sm = sm_ref[...]                            # (1, C) f32 == s * m_list

    tn, c = x.shape
    col = lax.broadcasted_iota(jnp.int32, (tn, c), 1)
    onehot = col == tgt                         # == index.scatter_(1, target, 1)

    # z = s * where(onehot, x - m, x) == s*x - where(onehot, s*m, 0)
    z = x * s - jnp.where(onehot, sm, 0.0)

    # cross_entropy(z, target) per row = logsumexp(z) - z[target]
    zmax = jnp.max(z, axis=1, keepdims=True)
    lse = zmax + jnp.log(jnp.sum(jnp.exp(z - zmax), axis=1, keepdims=True))
    z_t = jnp.sum(jnp.where(onehot, z, 0.0), axis=1, keepdims=True)
    per_sample = lse - z_t                      # (tile_n, 1)

    # mask rows past the true batch size (contents of the overhanging edge
    # block are unspecified; the select zeroes them before they reach the sum)
    row = i * tile_n + lax.broadcasted_iota(jnp.int32, (tn, 1), 0)
    per_sample = jnp.where(row < n_valid, per_sample, 0.0)

    acc_ref[...] += per_sample                  # vector accumulator, no per-step reduce

    @pl.when(i == n_tiles - 1)
    def _finalize():
        out_ref[...] = jnp.broadcast_to(
            jnp.sum(acc_ref[...], keepdims=True), out_ref.shape)


def _vmem_budget():
    """Return (vmem_limit_bytes, tile_vmem_budget_bytes) for this generation."""
    try:
        phys = int(pltpu.get_tpu_info().vmem_capacity_bytes)
    except Exception:
        phys = 64 * 1024 * 1024                 # safe floor across all generations
    vmem_limit = min(phys * 3 // 4, 96 * 1024 * 1024)   # ~48 MiB v7x, 96 MiB v5e/v6e
    tile_budget = min(max(vmem_limit - 8 * 1024 * 1024, 8 * 1024 * 1024),
                      64 * 1024 * 1024)
    return vmem_limit, tile_budget


def _pick_tile_n(n, c, itemsize, tile_budget):
    """Largest batch tile whose total VMEM footprint (2x double-buffered input
    + f32 compute temporaries) stays inside the budget."""
    c_lanes = max(_LANES, -(-c // _LANES) * _LANES)      # lane-padded width in VMEM
    per_row = c_lanes * (2 * itemsize + _TEMP_F32_PER_ELEM * 4) + 64
    t = max(_SUBLANES, tile_budget // per_row)
    # multiple of 32 keeps packed (bf16/int8) sublane loads unmasked; costless f32
    t = (t // 32) * 32 if t >= 32 else (t // _SUBLANES) * _SUBLANES
    align = 32 if itemsize < 4 else _SUBLANES
    n_ceil = -(-n // align) * align
    # TODO(synk): for very large C (tens of thousands) chunk the class axis with
    # an in-kernel online logsumexp instead of letting tile_n shrink to 8 rows.
    return max(_SUBLANES, min(t, n_ceil))


def ldam_loss(x, target, m_list, *, s=30.0):
    """x: (N, C) float logits, target: (N,) int labels, m_list: (C,) f32 margins."""
    n, c = x.shape
    vmem_limit, tile_budget = _vmem_budget()
    tile_n = _pick_tile_n(n, c, x.dtype.itemsize, tile_budget)
    n_tiles = -(-n // tile_n)

    tgt = target.astype(jnp.int32).reshape(n, 1)
    sm = (jnp.float32(s) * m_list.astype(jnp.float32)).reshape(1, c)  # s folded in

    kernel = functools.partial(_ldam_kernel, s=float(s), n_valid=n, tile_n=tile_n)

    cost = pl.CostEstimate(
        flops=8 * n * c,
        transcendentals=n * c,
        bytes_accessed=n * c * x.dtype.itemsize + n * 4 + c * 4 + _LANES * 4,
    )

    out = pl.pallas_call(
        kernel,
        out_shape=jax.ShapeDtypeStruct((1, _LANES), jnp.float32),
        grid_spec=pltpu.PrefetchScalarGridSpec(
            num_scalar_prefetch=0,
            grid=(n_tiles,),
            in_specs=[
                pl.BlockSpec((tile_n, c), lambda i: (i, 0)),   # logits, native dtype
                pl.BlockSpec((tile_n, 1), lambda i: (i, 0)),   # targets
                pl.BlockSpec((1, c), lambda i: (0, 0)),        # s * margins (resident)
            ],
            out_specs=pl.BlockSpec((1, _LANES), lambda i: (0, 0)),
            scratch_shapes=[pltpu.VMEM((tile_n, 1), jnp.float32)],
        ),
        compiler_params=pltpu.CompilerParams(
            dimension_semantics=("arbitrary",),
            vmem_limit_bytes=int(vmem_limit),
        ),
        cost_estimate=cost,
    )(x, tgt, sm)

    # sum of per-sample losses -> mean over the TRUE batch size.
    # TODO(synk): only reduction='mean' with weight=None (module defaults) implemented.
    return out[0, 0] / jnp.float32(n)


def make_m_list(cls_num_list, max_m=0.3):
    m = 1.0 / np.sqrt(np.sqrt(np.asarray(cls_num_list, dtype=np.float64)))
    m = m * (max_m / np.max(m))
    return jnp.asarray(m, dtype=jnp.float32)


def _ref_loss(x, target, m_list, s):
    c = x.shape[1]
    onehot = jax.nn.one_hot(target, c, dtype=jnp.float32)
    batch_m = (onehot * m_list[None, :]).sum(axis=1, keepdims=True)
    xf = x.astype(jnp.float32)
    out = jnp.where(onehot.astype(bool), xf - batch_m, xf)
    z = s * out
    return jnp.mean(jax.nn.logsumexp(z, axis=1) - (z * onehot).sum(axis=1))


if __name__ == "__main__":
    # -- case 1: module-sized example (batch=8, classes=16) --------------------
    key = jax.random.PRNGKey(0)
    N, C = 8, 16
    kx, kt = jax.random.split(key)
    x = jax.random.normal(kx, (N, C), dtype=jnp.float32)
    target = jax.random.randint(kt, (N,), 0, C, dtype=jnp.int32)
    cls_num_list = [100, 80, 64, 50, 40, 32, 25, 20, 16, 12, 10, 8, 6, 5, 4, 3]
    m_list = make_m_list(cls_num_list, max_m=0.3)

    loss = ldam_loss(x, target, m_list, s=30.0)
    jax.block_until_ready(loss)
    ref = _ref_loss(x, target, m_list, 30.0)
    assert jnp.allclose(loss, ref, rtol=1e-5, atol=1e-5), (loss, ref)

    # -- case 2: ragged batch & class tails (exercises edge-block masking) -----
    N2, C2 = 50, 37
    kx2, kt2 = jax.random.split(jax.random.PRNGKey(1))
    x2 = jax.random.normal(kx2, (N2, C2), dtype=jnp.float32)
    target2 = jax.random.randint(kt2, (N2,), 0, C2, dtype=jnp.int32)
    m_list2 = make_m_list(np.linspace(3.0, 300.0, C2), max_m=0.3)

    loss2 = ldam_loss(x2, target2, m_list2, s=30.0)
    jax.block_until_ready(loss2)
    ref2 = _ref_loss(x2, target2, m_list2, 30.0)
    assert jnp.allclose(loss2, ref2, rtol=1e-4, atol=1e-4), (loss2, ref2)

    print("KERNEL_OK")
</pallas_src>

<mosaic_0001>
module attributes {stable_mosaic.version = 11 : i64} {
  func.func @_ldam_kernel(%arg0: i32, %arg1: memref<8x16xf32, #tpu.memory_space<vmem>>, %arg2: memref<8x1xi32, #tpu.memory_space<vmem>>, %arg3: memref<1x16xf32, #tpu.memory_space<vmem>>, %arg4: memref<1x128xf32, #tpu.memory_space<vmem>>, %arg5: memref<8x1xf32, #tpu.memory_space<vmem>>) attributes {dimension_semantics = [#tpu.dimension_semantics<arbitrary>], iteration_bounds = array<i64: 1>, scalar_prefetch = 0 : i64, scratch_operands = 1 : i64, tpu.core_type = #tpu.core_type<tc>, window_params = [{transform_indices = @transform_0, window_bounds = array<i64: 8, 16>}, {transform_indices = @transform_1, window_bounds = array<i64: 8, 1>}, {pipeline_mode = #tpu.pipeline_mode<synchronous>, transform_indices = @transform_2, window_bounds = array<i64: 1, 16>}, {pipeline_mode = #tpu.pipeline_mode<synchronous>, transform_indices = @transform_3, window_bounds = array<i64: 1, 128>}]} {
    %c0_i32 = arith.constant 0 : i32
    %0 = arith.cmpi eq, %arg0, %c0_i32 : i32
    %1 = arith.extui %0 : i1 to i32
    %c0_i32_0 = arith.constant 0 : i32
    %2 = arith.cmpi ne, %1, %c0_i32_0 : i32
    scf.if %2 {
      %cst_19 = arith.constant 0.000000e+00 : f32
      %44 = vector.broadcast %cst_19 : f32 to vector<8x1xf32>
      %c0_20 = arith.constant 0 : index
      %c0_21 = arith.constant 0 : index
      %45 = vector.load %arg5[%c0_20, %c0_21] : memref<8x1xf32, #tpu.memory_space<vmem>>, vector<8x1xf32>
      tpu.vector_store %arg5[%c0_20, %c0_21], %44 {strides = array<i32>} : memref<8x1xf32, #tpu.memory_space<vmem>>, vector<8x1xf32>,
    } else {
    }
    %c0 = arith.constant 0 : index
    %c0_1 = arith.constant 0 : index
    %3 = vector.load %arg1[%c0, %c0_1] : memref<8x16xf32, #tpu.memory_space<vmem>>, vector<8x16xf32>
    %c0_2 = arith.constant 0 : index
    %c0_3 = arith.constant 0 : index
    %4 = vector.load %arg2[%c0_2, %c0_3] : memref<8x1xi32, #tpu.memory_space<vmem>>, vector<8x1xi32>
    %c0_4 = arith.constant 0 : index
    %c0_5 = arith.constant 0 : index
    %5 = vector.load %arg3[%c0_4, %c0_5] : memref<1x16xf32, #tpu.memory_space<vmem>>, vector<1x16xf32>
    %6 = tpu.iota {dimensions = array<i32: 1>} : vector<8x16xi32>
    %7 = vector.broadcast %4 : vector<8x1xi32> to vector<8x16xi32>
    %8 = arith.cmpi eq, %6, %7 : vector<8x16xi32>
    %cst = arith.constant 3.000000e+01 : f32
    %9 = vector.broadcast %cst : f32 to vector<8x16xf32>
    %10 = arith.mulf %3, %9 : vector<8x16xf32>
    %cst_6 = arith.constant 0.000000e+00 : f32
    %11 = vector.shape_cast %5 : vector<1x16xf32> to vector<1x16xf32>
    %12 = vector.broadcast %11 : vector<1x16xf32> to vector<8x16xf32>
    %13 = vector.broadcast %cst_6 : f32 to vector<8x16xf32>
    %14 = arith.select %8, %12, %13 : vector<8x16xi1>, vector<8x16xf32>
    %15 = arith.subf %10, %14 : vector<8x16xf32>
    %cst_7 = arith.constant dense<0xFF800000> : vector<8xf32>
    %16 = vector.multi_reduction <maximumf>, %15, %cst_7 [1] : vector<8x16xf32> to vector<8xf32>
    %17 = vector.shape_cast %16 : vector<8xf32> to vector<8x1xf32>
    %18 = vector.broadcast %17 : vector<8x1xf32> to vector<8x16xf32>
    %19 = arith.subf %15, %18 : vector<8x16xf32>
    %20 = math.exp %19 : vector<8x16xf32>
    %cst_8 = arith.constant dense<0.000000e+00> : vector<8xf32>
    %21 = vector.multi_reduction <add>, %20, %cst_8 [1] : vector<8x16xf32> to vector<8xf32>
    %22 = vector.shape_cast %21 : vector<8xf32> to vector<8x1xf32>
    %23 = math.log %22 : vector<8x1xf32>
    %24 = arith.addf %17, %23 : vector<8x1xf32>
    %cst_9 = arith.constant 0.000000e+00 : f32
    %25 = vector.broadcast %cst_9 : f32 to vector<8x16xf32>
    %26 = arith.select %8, %15, %25 : vector<8x16xi1>, vector<8x16xf32>
    %cst_10 = arith.constant dense<0.000000e+00> : vector<8xf32>
    %27 = vector.multi_reduction <add>, %26, %cst_10 [1] : vector<8x16xf32> to vector<8xf32>
    %28 = vector.shape_cast %27 : vector<8xf32> to vector<8x1xf32>
    %29 = arith.subf %24, %28 : vector<8x1xf32>
    %c8_i32 = arith.constant 8 : i32
    %30 = arith.muli %arg0, %c8_i32 : i32
    %31 = tpu.iota {dimensions = array<i32: 0>} : vector<8x1xi32>
    %32 = vector.broadcast %30 : i32 to vector<8x1xi32>
    %33 = arith.addi %32, %31 : vector<8x1xi32>
    %c8_i32_11 = arith.constant 8 : i32
    %34 = vector.broadcast %c8_i32_11 : i32 to vector<8x1xi32>
    %35 = arith.cmpi slt, %33, %34 : vector<8x1xi32>
    %cst_12 = arith.constant 0.000000e+00 : f32
    %36 = vector.broadcast %cst_12 : f32 to vector<8x1xf32>
    %37 = arith.select %35, %29, %36 : vector<8x1xi1>, vector<8x1xf32>
    %c0_13 = arith.constant 0 : index
    %c0_14 = arith.constant 0 : index
    %38 = vector.load %arg5[%c0_13, %c0_14] : memref<8x1xf32, #tpu.memory_space<vmem>>, vector<8x1xf32>
    %39 = arith.addf %38, %37 : vector<8x1xf32>
    %c0_15 = arith.constant 0 : index
    %c0_16 = arith.constant 0 : index
    %40 = vector.load %arg5[%c0_15, %c0_16] : memref<8x1xf32, #tpu.memory_space<vmem>>, vector<8x1xf32>
    tpu.vector_store %arg5[%c0_15, %c0_16], %39 {strides = array<i32>} : memref<8x1xf32, #tpu.memory_space<vmem>>, vector<8x1xf32>,
    %c0_i32_17 = arith.constant 0 : i32
    %41 = arith.cmpi eq, %arg0, %c0_i32_17 : i32
    %42 = arith.extui %41 : i1 to i32
    %c0_i32_18 = arith.constant 0 : i32
    %43 = arith.cmpi ne, %42, %c0_i32_18 : i32
    scf.if %43 {
      %c0_19 = arith.constant 0 : index
      %c0_20 = arith.constant 0 : index
      %44 = vector.load %arg5[%c0_19, %c0_20] : memref<8x1xf32, #tpu.memory_space<vmem>>, vector<8x1xf32>
      %45 = vector.shape_cast %44 : vector<8x1xf32> to vector<1x8x1xf32>
      %cst_21 = arith.constant dense<0.000000e+00> : vector<1xf32>
      %46 = vector.multi_reduction <add>, %45, %cst_21 [1, 2] : vector<1x8x1xf32> to vector<1xf32>
      %47 = vector.shape_cast %46 : vector<1xf32> to vector<1x1x1xf32>
      %48 = vector.extract %47[0, 0, 0] : f32 from vector<1x1x1xf32>
      %49 = vector.broadcast %48 : f32 to vector<1x1xf32>
      %50 = vector.shape_cast %49 : vector<1x1xf32> to vector<1x1xf32>
      %51 = vector.broadcast %50 : vector<1x1xf32> to vector<1x128xf32>
      %c0_22 = arith.constant 0 : index
      %c0_23 = arith.constant 0 : index
      %52 = vector.load %arg4[%c0_22, %c0_23] : memref<1x128xf32, #tpu.memory_space<vmem>>, vector<1x128xf32>
      tpu.vector_store %arg4[%c0_22, %c0_23], %51 {strides = array<i32>} : memref<1x128xf32, #tpu.memory_space<vmem>>, vector<1x128xf32>,
    } else {
    }
    return
  }
  func.func @transform_0(%arg0: i32) -> (i32, i32) {
    %c0_i32 = arith.constant 0 : i32
    %c0_i32_0 = arith.constant 0 : i32
    return %arg0, %c0_i32 : i32, i32
  }
  func.func @transform_1(%arg0: i32) -> (i32, i32) {
    %c0_i32 = arith.constant 0 : i32
    %c0_i32_0 = arith.constant 0 : i32
    return %arg0, %c0_i32 : i32, i32
  }
  func.func @transform_2(%arg0: i32) -> (i32, i32) {
    %c0_i32 = arith.constant 0 : i32
    %c0_i32_0 = arith.constant 0 : i32
    %c0_i32_1 = arith.constant 0 : i32
    return %c0_i32, %c0_i32_0 : i32, i32
  }
  func.func @transform_3(%arg0: i32) -> (i32, i32) {
    %c0_i32 = arith.constant 0 : i32
    %c0_i32_0 = arith.constant 0 : i32
    %c0_i32_1 = arith.constant 0 : i32
    return %c0_i32, %c0_i32_0 : i32, i32
  }
}

</mosaic_0001>

<llo_original>
// kernel: tpu_custom_call.1
$region0: #{tpu_custom_call.1}
  #allocation0 [shape = 'u32[]', space=smem, size = 0x4, offset = 0x4, fixed_abs, tag = 'smem constant byte address 0x4 - core index']
  #allocation1 [shape = 'u32[144,128]{1,0:T(1,128)}', space=vmem, size = 0x12000, scoped, tag = 'internal scratch']
  #allocation2 [shape = 'f32[8,1]{1,0:T(8,128)}', space=vmem, size = 0x1000, scoped, tag = 'scratch operand']
  %s0 = inlined_call_operand.vmem [shape: f32[8,16], index: 0, kind: input, shape index: {}]
  %s1 = inlined_call_operand.vmem [shape: s32[8,1], index: 1, kind: input, shape index: {}]
  %s2 = inlined_call_operand.vmem [shape: f32[1,16], index: 2, kind: input, shape index: {}]
  %s3 = inlined_call_operand.hbm [shape: f32[1,128], index: 3, kind: output, shape index: {}]
  %s4 = sld [smem:[#allocation0]]
  $region30: #{tpu_custom_call.1} parent=0
    _
  %s6 = ssub.s32 1, %s4
  %s7 = scalar_select 0, %s6, %s4
  $region1: #{tpu_custom_call.1} parent=0
    #allocation3 [shape = 'u8[512]{0}', space=vmem, size = 0x400, scoped, tag = 'output window, operand 0, single buffered']
    #allocation4 [shape = 's32[1]{0}', space=sflag, size = 0x4, scoped, tag = 'scoped memory for tpu_custom_call.1']
    %8 = vsyncpa [#allocation4], 0
    // Predicated region
    $region2: #{tpu_custom_call.1} parent=1 // pred_check
      _
    $region3: #{tpu_custom_call.1} parent=1 // pred_check_branch
      %10 = sbr.rel (0) target = $region5
    $region4: #{tpu_custom_call.1} parent=1 // pred_region
      _
    $region5: #{tpu_custom_call.1} parent=1 // pred_fallthru
      _
    // Predicated region
    $region6: #{tpu_custom_call.1} parent=1 // pred_check
      _
    $region7: #{tpu_custom_call.1} parent=1 // pred_check_branch
      %12 = sbr.rel (0) target = $region9
    $region8: #{tpu_custom_call.1} parent=1 // pred_region
      _
    $region9: #{tpu_custom_call.1} parent=1 // pred_fallthru
      _
    // Predicated region
    $region10: #{tpu_custom_call.1} parent=1 // pred_check
      _
    $region11: #{tpu_custom_call.1} parent=1 // pred_check_branch
      %14 = sbr.rel (0) target = $region13
    $region12: #{tpu_custom_call.1} parent=1 // pred_region
      _
    $region13: #{tpu_custom_call.1} parent=1 // pred_fallthru
      _
    %p15 = scmp.eq.s32.totalorder 0, 0
    // Predicated region
    $region14: #{tpu_custom_call.1} parent=1 // pred_check
      %p16 = pneg %p15
    $region15: #{tpu_custom_call.1} parent=1 // pred_check_branch
      %18 = sbr.rel (%p16) target = $region17
    $region16: #{tpu_custom_call.1} parent=1 // pred_region
      %vm19 = vcmask 7168
      %20 = vst.msk [vmem:[#allocation2] sm:$0xff] %vm19, 0.0
    $region17: #{tpu_custom_call.1} parent=1 // pred_fallthru
      _
    %v21 = vld [vmem:[%s0] sm:$0xff]
    %v22 = vld [vmem:[%s1] sm:$0xff]
    %v23 = vld [vmem:[%s2] sm:$0x1]
    %v24 = vlaneseq
    %v25 = vand.u32 %v24, 127
    %26 = vset.pattern.permute.xlu0 0
    %27 = vperm.xlu0 %26, %v22
    %v28 = vpop.permute.xlu0 %27
    %vm29 = vcmp.eq.s32.totalorder %v25, %v28
    %v30 = vmul.f32 %v21, 30.0
    %v32 = vlaneseq
    %v33 = vshrl.u32 %v32, 7
    %v34 = vsub.s32 0, %v33
    %v35 = vrot.slane %v23, %v34
    %v37 = vsel %vm29, %v35, 0.0
    %v38 = vsub.f32 %v30, %v37
    %vm39 = vcmask 130048
    %v40 = vsel %vm39, %v38, -inf
    %41 = vmax.xlane.f32.xlu0 %v40
    %v42 = vpop.xlane.xlu0 %41
    %v43 = vsub.f32 %v38, %v42
    %v44 = vmul.f32 %v43, 1.442695
    %v45 = vpow.pop %v44
    %v46 = vsel %vm39, %v45, 0.0
    %47 = vadd.xlane.f32.xlu0 %v46
    %v48 = vpop.xlane.xlu0 %47
    %v49 = vlog2.pop %v48
    %v50 = vmul.f32 %v49, 0.6931472
    %v51 = vadd.f32 %v42, %v50
    %v52 = vsel %vm29, %v38, 0.0
    %v53 = vsel %vm39, %v52, 0.0
    %54 = vadd.xlane.f32.xlu0 %v53
    %v55 = vpop.xlane.xlu0 %54
    %v56 = vsub.f32 %v51, %v55
    %s57 = smul.u32 0, 8
    %v58 = vlaneseq
    %v59 = vshrl.u32 %v58, 7
    %v60 = vstv %s57
    %v61 = vadd.s32 %v60, %v59
    %vm62 = vcmp.lt.s32.totalorder %v61, 8
    %v63 = vsel %vm62, %v56, 0.0
    %v64 = vld [vmem:[#allocation2] sm:$0xff]
    %v65 = vadd.f32 %v64, %v63
    %vm66 = vcmask 7168
    %67 = vst.msk [vmem:[#allocation2] sm:$0xff] %vm66, %v65
    // Predicated region
    $region18: #{tpu_custom_call.1} parent=1 // pred_check
      %p68 = pneg %p15
    $region19: #{tpu_custom_call.1} parent=1 // pred_check_branch
      %70 = sbr.rel (%p68) target = $region21
    $region20: #{tpu_custom_call.1} parent=1 // pred_region
      %v71 = vld [vmem:[#allocation2] sm:$0xff]
      %v72 = vsel %vm66, %v71, 0.0
      %73 = vadd.xlane.f32.xlu0 %v72
      %v74 = vpop.xlane.xlu0 %73
      %v75 = vrot.slane %v74, 4
      %v76 = vadd.f32 %v74, %v75
      %v77 = vrot.slane %v76, 2
      %v78 = vadd.f32 %v76, %v77
      %v79 = vrot.slane %v78, 1
      %v80 = vadd.f32 %v78, %v79
      %s81 = vtos %v80
      %v82 = vstv %s81
      %83 = vst [vmem:[#allocation3] sm:$0x1] %v82
    $region21: #{tpu_custom_call.1} parent=1 // pred_fallthru
      _
    // Predicated region
    $region22: #{tpu_custom_call.1} parent=1 // pred_check
      _
    $region23: #{tpu_custom_call.1} parent=1 // pred_check_branch
      %85 = sbr.rel (0) target = $region25
    $region24: #{tpu_custom_call.1} parent=1 // pred_region
      %s87 = ssub.s32 16, 16
      %88 = vsyncadd [#allocation4], %s87
      %s90 = sshll.u32 [#allocation3], 4
      %s91 = int_to_ptr.vmem [resolvable:$true] %s90
      %93 = dma.vmem_to_hbm [thread:$0]  %s91, 16, %s3, [#allocation4]
    $region25: #{tpu_custom_call.1} parent=1 // pred_fallthru
      _
    // Predicated region
    $region26: #{tpu_custom_call.1} parent=1 // pred_check
      _
    $region27: #{tpu_custom_call.1} parent=1 // pred_check_branch
      %95 = sbr.rel (0) target = $region29
    $region28: #{tpu_custom_call.1} parent=1 // pred_region
      %96 = dma.done [#allocation4], 16
    $region29: #{tpu_custom_call.1} parent=1 // pred_fallthru
      _
    %97 = vsyncpa [#allocation4], 1

</llo_original>
